<compile_context>
chip_gen: v6e
topology: v6e:2x2x1
jax: 0.10.0
libtpu: 0.0.40
codegen_flags: <defaults>
</compile_context>

<pallas_src>
import numpy as np
import jax
import jax.numpy as jnp
from jax import lax
from jax.experimental import pallas as pl
from jax.experimental.pallas import tpu as pltpu

# Network dimensions implied by the PyTorch module: Linear(16, 1) after the
# 2x2 maxpool of conv2 forces a 6x6 single-channel input.
H = W = 6
K = 3
C1 = 6                       # conv1 out channels
C2 = 16                      # conv2 out channels
H1 = W1 = H - K + 1          # 4
H2 = W2 = H1 - K + 1         # 2
F_IN = H * W                 # 36  input features per sample
F_MID = H1 * W1 * C1         # 96  conv1 output features
F_OUT = H2 * W2 * C2         # 64  conv2 output features
LANES = 128                  # output lane padding -> unmasked stores
NB = 8                       # batch rows per grid step (one f32 sublane tile)


def net2_kernel(x_ref, w1_ref, b1_ref, w2_ref, b2_ref, fcw_ref, fcb_ref, out_ref):
    x = x_ref[...]                                             # (NB, 36)
    # conv1 as GEMM on the MXU: (NB, 36) @ (36, 96) + bias, ReLU
    h1 = jnp.dot(x, w1_ref[...], preferred_element_type=jnp.float32)
    h1 = jnp.maximum(h1 + b1_ref[...], 0.0)                    # (NB, 96)
    # conv2 as GEMM on the MXU: (NB, 96) @ (96, 64) + bias, ReLU
    h2 = jnp.dot(h1, w2_ref[...], preferred_element_type=jnp.float32)
    h2 = jnp.maximum(h2 + b2_ref[...], 0.0)                    # (NB, 64)
    # 2x2 maxpool over the 2x2 spatial grid == elementwise max of the four
    # 16-lane channel groups (lane = (h2*2+w2)*16 + channel).
    pooled = jnp.maximum(jnp.maximum(h2[:, 0 * C2:1 * C2], h2[:, 1 * C2:2 * C2]),
                         jnp.maximum(h2[:, 2 * C2:3 * C2], h2[:, 3 * C2:4 * C2]))
    # fc1: (NB, 16) @ (16, 128) + bias; only lane 0 carries the result.
    out = jnp.dot(pooled, fcw_ref[...], preferred_element_type=jnp.float32)
    out_ref[...] = out + fcb_ref[...]                          # (NB, 128)


def _conv_as_gemm_weights(w, hin, win):
    """(Cout, Cin, K, K) VALID-conv weights -> dense (hin*win*Cin, hout*wout*Cout)
    Toeplitz matrix M such that flat(x) @ M == conv, with
      row = (hi*win + wi)*Cin + ci   and   col = (ho*wout + wo)*Cout + co."""
    cout, cin, kh, kw = w.shape
    hout, wout = hin - kh + 1, win - kw + 1
    ho, wo, co, ci, dh, dw = np.meshgrid(
        np.arange(hout), np.arange(wout), np.arange(cout),
        np.arange(cin), np.arange(kh), np.arange(kw), indexing="ij")
    rows = ((ho + dh) * win + (wo + dw)) * cin + ci
    cols = (ho * wout + wo) * cout + co
    vals = w[co.ravel(), ci.ravel(), dh.ravel(), dw.ravel()]
    m = jnp.zeros((hin * win * cin, hout * wout * cout), w.dtype)
    return m.at[rows.ravel(), cols.ravel()].set(vals)


@jax.jit
def net2_forward(x, w1, b1, w2, b2, fcw, fcb):
    n = x.shape[0]
    n_pad = ((n + NB - 1) // NB) * NB

    # Lane-dense input: (batch, 36) with the flattened 6x6 spatial on lanes.
    x_flat = x.reshape(n, F_IN)
    if n_pad != n:
        x_flat = jnp.pad(x_flat, ((0, n_pad - n), (0, 0)))

    # One-time weight "im2col": convolutions become dense GEMMs. (In a real
    # deployment these would be precomputed once, not per call.)
    w1m = _conv_as_gemm_weights(w1, H, W)                      # (36, 96)
    b1v = jnp.tile(b1, H1 * W1)[None, :]                       # (1, 96)
    w2m = _conv_as_gemm_weights(w2, H1, W1)                    # (96, 64)
    b2v = jnp.tile(b2, H2 * W2)[None, :]                       # (1, 64)
    fcw_p = jnp.zeros((C2, LANES), jnp.float32).at[:, 0].set(fcw[0])  # (16, 128)
    fcb_p = jnp.zeros((1, LANES), jnp.float32).at[0, 0].set(fcb[0])   # (1, 128)

    full = lambda i: (0, 0)   # weights/biases: same (only) block every step
    out = pl.pallas_call(
        net2_kernel,
        out_shape=jax.ShapeDtypeStruct((n_pad, LANES), jnp.float32),
        grid=(n_pad // NB,),
        in_specs=[
            pl.BlockSpec((NB, F_IN), lambda i: (i, 0)),
            pl.BlockSpec(w1m.shape, full),
            pl.BlockSpec(b1v.shape, full),
            pl.BlockSpec(w2m.shape, full),
            pl.BlockSpec(b2v.shape, full),
            pl.BlockSpec(fcw_p.shape, full),
            pl.BlockSpec(fcb_p.shape, full),
        ],
        out_specs=pl.BlockSpec((NB, LANES), lambda i: (i, 0)),
        compiler_params=pltpu.CompilerParams(
            dimension_semantics=("parallel",)),
    )(x_flat, w1m, b1v, w2m, b2v, fcw_p, fcb_p)
    return out[:n, :1]


def net2_ref(x, w1, b1, w2, b2, fcw, fcb):
    """Pure-JAX reference replicating the PyTorch forward (exact f32)."""
    dn = ("NCHW", "OIHW", "NCHW")
    hp = lax.Precision.HIGHEST
    y = lax.conv_general_dilated(x, w1, (1, 1), "VALID",
                                 dimension_numbers=dn, precision=hp)
    y = jnp.maximum(y + b1[None, :, None, None], 0.0)
    y = lax.conv_general_dilated(y, w2, (1, 1), "VALID",
                                 dimension_numbers=dn, precision=hp)
    y = jnp.maximum(y + b2[None, :, None, None], 0.0)
    y = lax.reduce_window(y, -jnp.inf, lax.max, (1, 1, 2, 2), (1, 1, 2, 2), "VALID")
    y = y.reshape(x.shape[0], -1)                              # (N, 16)
    return jnp.dot(y, fcw.T, precision=hp) + fcb               # (N, 1)


if __name__ == "__main__":
    key = jax.random.PRNGKey(0)
    ks = jax.random.split(key, 7)
    N = 16  # two 8-row batch blocks -> exercises the parallel grid axis
    x = jax.random.normal(ks[0], (N, 1, H, W), jnp.float32)
    w1 = jax.random.normal(ks[1], (C1, 1, K, K), jnp.float32) * 0.2
    b1 = jax.random.normal(ks[2], (C1,), jnp.float32) * 0.1
    w2 = jax.random.normal(ks[3], (C2, C1, K, K), jnp.float32) * 0.1
    b2 = jax.random.normal(ks[4], (C2,), jnp.float32) * 0.1
    fcw = jax.random.normal(ks[5], (1, C2), jnp.float32) * 0.2
    fcb = jax.random.normal(ks[6], (1,), jnp.float32) * 0.1

    out = net2_forward(x, w1, b1, w2, b2, fcw, fcb)
    jax.block_until_ready(out)

    ref = net2_ref(x, w1, b1, w2, b2, fcw, fcb)
    assert out.shape == (N, 1), out.shape
    assert jnp.allclose(out, ref, atol=1e-4, rtol=1e-4), (out, ref)
    print("KERNEL_OK")
</pallas_src>

<mosaic_0001>
module attributes {stable_mosaic.version = 11 : i64} {
  func.func @net2_kernel(%arg0: i32, %arg1: memref<8x36xf32, #tpu.memory_space<vmem>>, %arg2: memref<36x96xf32, #tpu.memory_space<vmem>>, %arg3: memref<1x96xf32, #tpu.memory_space<vmem>>, %arg4: memref<96x64xf32, #tpu.memory_space<vmem>>, %arg5: memref<1x64xf32, #tpu.memory_space<vmem>>, %arg6: memref<16x128xf32, #tpu.memory_space<vmem>>, %arg7: memref<1x128xf32, #tpu.memory_space<vmem>>, %arg8: memref<8x128xf32, #tpu.memory_space<vmem>>) attributes {dimension_semantics = [#tpu.dimension_semantics<parallel>], iteration_bounds = array<i64: 2>, scalar_prefetch = 0 : i64, scratch_operands = 0 : i64, tpu.core_type = #tpu.core_type<tc>, window_params = [{transform_indices = @transform_0, window_bounds = array<i64: 8, 36>}, {pipeline_mode = #tpu.pipeline_mode<synchronous>, transform_indices = @transform_1, window_bounds = array<i64: 36, 96>}, {pipeline_mode = #tpu.pipeline_mode<synchronous>, transform_indices = @transform_2, window_bounds = array<i64: 1, 96>}, {pipeline_mode = #tpu.pipeline_mode<synchronous>, transform_indices = @transform_3, window_bounds = array<i64: 96, 64>}, {pipeline_mode = #tpu.pipeline_mode<synchronous>, transform_indices = @transform_4, window_bounds = array<i64: 1, 64>}, {pipeline_mode = #tpu.pipeline_mode<synchronous>, transform_indices = @transform_5, window_bounds = array<i64: 16, 128>}, {pipeline_mode = #tpu.pipeline_mode<synchronous>, transform_indices = @transform_6, window_bounds = array<i64: 1, 128>}, {transform_indices = @transform_7, window_bounds = array<i64: 8, 128>}]} {
    %c0 = arith.constant 0 : index
    %c0_0 = arith.constant 0 : index
    %0 = vector.load %arg1[%c0, %c0_0] : memref<8x36xf32, #tpu.memory_space<vmem>>, vector<8x36xf32>
    %c0_1 = arith.constant 0 : index
    %c0_2 = arith.constant 0 : index
    %1 = vector.load %arg2[%c0_1, %c0_2] : memref<36x96xf32, #tpu.memory_space<vmem>>, vector<36x96xf32>
    %cst = arith.constant dense<0.000000e+00> : vector<8x96xf32>
    %2 = tpu.matmul %0, %1, %cst {dimension_numbers = #tpu.dot_dimension_numbers<[1], [0], [0], [1], [0, 0, 1, 1], [], []>} : vector<8x36xf32>, vector<36x96xf32>, vector<8x96xf32> -> vector<8x96xf32>
    %c0_3 = arith.constant 0 : index
    %c0_4 = arith.constant 0 : index
    %3 = vector.load %arg3[%c0_3, %c0_4] : memref<1x96xf32, #tpu.memory_space<vmem>>, vector<1x96xf32>
    %4 = vector.broadcast %3 : vector<1x96xf32> to vector<8x96xf32>
    %5 = arith.addf %2, %4 : vector<8x96xf32>
    %cst_5 = arith.constant 0.000000e+00 : f32
    %6 = vector.broadcast %cst_5 : f32 to vector<8x96xf32>
    %7 = arith.maximumf %5, %6 : vector<8x96xf32>
    %c0_6 = arith.constant 0 : index
    %c0_7 = arith.constant 0 : index
    %8 = vector.load %arg4[%c0_6, %c0_7] : memref<96x64xf32, #tpu.memory_space<vmem>>, vector<96x64xf32>
    %cst_8 = arith.constant dense<0.000000e+00> : vector<8x64xf32>
    %9 = tpu.matmul %7, %8, %cst_8 {dimension_numbers = #tpu.dot_dimension_numbers<[1], [0], [0], [1], [0, 0, 1, 1], [], []>} : vector<8x96xf32>, vector<96x64xf32>, vector<8x64xf32> -> vector<8x64xf32>
    %c0_9 = arith.constant 0 : index
    %c0_10 = arith.constant 0 : index
    %10 = vector.load %arg5[%c0_9, %c0_10] : memref<1x64xf32, #tpu.memory_space<vmem>>, vector<1x64xf32>
    %11 = vector.broadcast %10 : vector<1x64xf32> to vector<8x64xf32>
    %12 = arith.addf %9, %11 : vector<8x64xf32>
    %cst_11 = arith.constant 0.000000e+00 : f32
    %13 = vector.broadcast %cst_11 : f32 to vector<8x64xf32>
    %14 = arith.maximumf %12, %13 : vector<8x64xf32>
    %15 = vector.extract_strided_slice %14 {offsets = [0, 0], sizes = [8, 16], strides = [1, 1]} : vector<8x64xf32> to vector<8x16xf32>
    %16 = vector.extract_strided_slice %14 {offsets = [0, 16], sizes = [8, 16], strides = [1, 1]} : vector<8x64xf32> to vector<8x16xf32>
    %17 = arith.maximumf %15, %16 : vector<8x16xf32>
    %18 = vector.extract_strided_slice %14 {offsets = [0, 32], sizes = [8, 16], strides = [1, 1]} : vector<8x64xf32> to vector<8x16xf32>
    %19 = vector.extract_strided_slice %14 {offsets = [0, 48], sizes = [8, 16], strides = [1, 1]} : vector<8x64xf32> to vector<8x16xf32>
    %20 = arith.maximumf %18, %19 : vector<8x16xf32>
    %21 = arith.maximumf %17, %20 : vector<8x16xf32>
    %c0_12 = arith.constant 0 : index
    %c0_13 = arith.constant 0 : index
    %22 = vector.load %arg6[%c0_12, %c0_13] : memref<16x128xf32, #tpu.memory_space<vmem>>, vector<16x128xf32>
    %cst_14 = arith.constant dense<0.000000e+00> : vector<8x128xf32>
    %23 = tpu.matmul %21, %22, %cst_14 {dimension_numbers = #tpu.dot_dimension_numbers<[1], [0], [0], [1], [0, 0, 1, 1], [], []>} : vector<8x16xf32>, vector<16x128xf32>, vector<8x128xf32> -> vector<8x128xf32>
    %c0_15 = arith.constant 0 : index
    %c0_16 = arith.constant 0 : index
    %24 = vector.load %arg7[%c0_15, %c0_16] : memref<1x128xf32, #tpu.memory_space<vmem>>, vector<1x128xf32>
    %25 = vector.broadcast %24 : vector<1x128xf32> to vector<8x128xf32>
    %26 = arith.addf %23, %25 : vector<8x128xf32>
    %c0_17 = arith.constant 0 : index
    %c0_18 = arith.constant 0 : index
    %27 = vector.load %arg8[%c0_17, %c0_18] : memref<8x128xf32, #tpu.memory_space<vmem>>, vector<8x128xf32>
    tpu.vector_store %arg8[%c0_17, %c0_18], %26 {strides = array<i32>} : memref<8x128xf32, #tpu.memory_space<vmem>>, vector<8x128xf32>,
    return
  }
  func.func @transform_0(%arg0: i32) -> (i32, i32) {
    %c0_i32 = arith.constant 0 : i32
    %c0_i32_0 = arith.constant 0 : i32
    return %arg0, %c0_i32 : i32, i32
  }
  func.func @transform_1(%arg0: i32) -> (i32, i32) {
    %c0_i32 = arith.constant 0 : i32
    %c0_i32_0 = arith.constant 0 : i32
    %c0_i32_1 = arith.constant 0 : i32
    return %c0_i32, %c0_i32_0 : i32, i32
  }
  func.func @transform_2(%arg0: i32) -> (i32, i32) {
    %c0_i32 = arith.constant 0 : i32
    %c0_i32_0 = arith.constant 0 : i32
    %c0_i32_1 = arith.constant 0 : i32
    return %c0_i32, %c0_i32_0 : i32, i32
  }
  func.func @transform_3(%arg0: i32) -> (i32, i32) {
    %c0_i32 = arith.constant 0 : i32
    %c0_i32_0 = arith.constant 0 : i32
    %c0_i32_1 = arith.constant 0 : i32
    return %c0_i32, %c0_i32_0 : i32, i32
  }
  func.func @transform_4(%arg0: i32) -> (i32, i32) {
    %c0_i32 = arith.constant 0 : i32
    %c0_i32_0 = arith.constant 0 : i32
    %c0_i32_1 = arith.constant 0 : i32
    return %c0_i32, %c0_i32_0 : i32, i32
  }
  func.func @transform_5(%arg0: i32) -> (i32, i32) {
    %c0_i32 = arith.constant 0 : i32
    %c0_i32_0 = arith.constant 0 : i32
    %c0_i32_1 = arith.constant 0 : i32
    return %c0_i32, %c0_i32_0 : i32, i32
  }
  func.func @transform_6(%arg0: i32) -> (i32, i32) {
    %c0_i32 = arith.constant 0 : i32
    %c0_i32_0 = arith.constant 0 : i32
    %c0_i32_1 = arith.constant 0 : i32
    return %c0_i32, %c0_i32_0 : i32, i32
  }
  func.func @transform_7(%arg0: i32) -> (i32, i32) {
    %c0_i32 = arith.constant 0 : i32
    %c0_i32_0 = arith.constant 0 : i32
    return %arg0, %c0_i32 : i32, i32
  }
}

</mosaic_0001>

<llo_original>
// kernel: tile.13
$region0: #{tile.13}
  #allocation0 [shape = 's32[1]{0}', space=sflag, size = 0x4, scoped, tag = 'scoped memory for tile.13']
  %s0 = inlined_call_operand.vmem [shape: f32[6], index: 0, kind: input, shape index: {}]
  %s1 = inlined_call_operand.vmem [shape: f32[16,6], index: 1, kind: output, shape index: {}]
  // Predicated region
  $region2: #{tile.13} parent=0 // pred_check
    _
  $region3: #{tile.13} parent=0 // pred_check_branch
    %3 = sbr.rel (0) target = $region5
  $region4: #{tile.13} parent=0 // pred_region
    _
  $region5: #{tile.13} parent=0 // pred_fallthru
    _
  %v4 = vld [vmem:[%s0] ss:$0 sm:$0xff]
  %5 = vst [vmem:[%s1] sm:$0xff] %v4
  %s6 = scalar_lea.vmem %s1, 8
  %7 = vst [vmem:[%s6] sm:$0xff] %v4

// kernel: tile.14
$region0: #{tile.14}
  %s0 = inlined_call_operand.vmem [shape: f32[16,6], index: 0, kind: input, shape index: {}]
  %s1 = inlined_call_operand.vmem [shape: f32[1,96], index: 1, kind: output, shape index: {}]
  $region1: #{tile.14} parent=0
    #allocation0 [shape = 'u8[4096]{0}', space=vmem, size = 0x1000, scoped, tag = 'scoped mem for output reshape']
    %v2 = vld [vmem:[%s0] sm:$0x1]
    %vm3 = vcmask 48128
    %4 = vst.msk [vmem:[#allocation0] sm:$0x1] %vm3, %v2
    %s5 = scalar_lea.vmem %s0, 15
    %v6 = vld [vmem:[%s5] sm:$0x1]
    %7 = vrot.lane.b32.xlu0 %v6, 90
    %v8 = vpop.permute.xlu0 %7
    %vm9 = vcmask 786128
    %10 = vst.msk [vmem:[#allocation0] sm:$0x1] %vm9, %v8
    %s11 = scalar_lea.vmem %s0, 14
    %v12 = vld [vmem:[%s11] sm:$0x1]
    %13 = vrot.lane.b32.xlu0 %v12, 84
    %v14 = vpop.permute.xlu0 %13
    %vm15 = vcmask 736928
    %16 = vst.msk [vmem:[#allocation0] sm:$0x1] %vm15, %v14
    %s17 = scalar_lea.vmem %s0, 13
    %v18 = vld [vmem:[%s17] sm:$0x1]
    %19 = vrot.lane.b32.xlu0 %v18, 78
    %v20 = vpop.permute.xlu0 %19
    %vm21 = vcmask 687728
    %22 = vst.msk [vmem:[#allocation0] sm:$0x1] %vm21, %v20
    %s23 = scalar_lea.vmem %s0, 12
    %v24 = vld [vmem:[%s23] sm:$0x1]
    %25 = vrot.lane.b32.xlu0 %v24, 72
    %v26 = vpop.permute.xlu0 %25
    %vm27 = vcmask 638528
    %28 = vst.msk [vmem:[#allocation0] sm:$0x1] %vm27, %v26
    %s29 = scalar_lea.vmem %s0, 11
    %v30 = vld [vmem:[%s29] sm:$0x1]
    %31 = vrot.lane.b32.xlu0 %v30, 66
    %v32 = vpop.permute.xlu0 %31
    %vm33 = vcmask 589328
    %34 = vst.msk [vmem:[#allocation0] sm:$0x1] %vm33, %v32
    %s35 = scalar_lea.vmem %s0, 10
    %v36 = vld [vmem:[%s35] sm:$0x1]
    %37 = vrot.lane.b32.xlu0 %v36, 60
    %v38 = vpop.permute.xlu0 %37
    %vm39 = vcmask 540128
    %40 = vst.msk [vmem:[#allocation0] sm:$0x1] %vm39, %v38
    %s41 = scalar_lea.vmem %s0, 9
    %v42 = vld [vmem:[%s41] sm:$0x1]
    %43 = vrot.lane.b32.xlu0 %v42, 54
    %v44 = vpop.permute.xlu0 %43
    %vm45 = vcmask 490928
    %46 = vst.msk [vmem:[#allocation0] sm:$0x1] %vm45, %v44
    %s47 = scalar_lea.vmem %s0, 8
    %v48 = vld [vmem:[%s47] sm:$0x1]
    %49 = vrot.lane.b32.xlu0 %v48, 48
    %v50 = vpop.permute.xlu0 %49
    %vm51 = vcmask 441728
    %52 = vst.msk [vmem:[#allocation0] sm:$0x1] %vm51, %v50
    %s53 = scalar_lea.vmem %s0, 7
    %v54 = vld [vmem:[%s53] sm:$0x1]
    %55 = vrot.lane.b32.xlu0 %v54, 42
    %v56 = vpop.permute.xlu0 %55
    %vm57 = vcmask 392528
    %58 = vst.msk [vmem:[#allocation0] sm:$0x1] %vm57, %v56
    %s59 = scalar_lea.vmem %s0, 6
    %v60 = vld [vmem:[%s59] sm:$0x1]
    %61 = vrot.lane.b32.xlu0 %v60, 36
    %v62 = vpop.permute.xlu0 %61
    %vm63 = vcmask 343328
    %64 = vst.msk [vmem:[#allocation0] sm:$0x1] %vm63, %v62
    %s65 = scalar_lea.vmem %s0, 5
    %v66 = vld [vmem:[%s65] sm:$0x1]
    %67 = vrot.lane.b32.xlu0 %v66, 30
    %v68 = vpop.permute.xlu0 %67
    %vm69 = vcmask 294128
    %70 = vst.msk [vmem:[#allocation0] sm:$0x1] %vm69, %v68
    %s71 = scalar_lea.vmem %s0, 4
    %v72 = vld [vmem:[%s71] sm:$0x1]
    %73 = vrot.lane.b32.xlu0 %v72, 24
    %v74 = vpop.permute.xlu0 %73
    %vm75 = vcmask 244928
    %76 = vst.msk [vmem:[#allocation0] sm:$0x1] %vm75, %v74
    %s77 = scalar_lea.vmem %s0, 3
    %v78 = vld [vmem:[%s77] sm:$0x1]
    %79 = vrot.lane.b32.xlu0 %v78, 18
    %v80 = vpop.permute.xlu0 %79
    %vm81 = vcmask 195728
    %82 = vst.msk [vmem:[#allocation0] sm:$0x1] %vm81, %v80
    %s83 = scalar_lea.vmem %s0, 2
    %v84 = vld [vmem:[%s83] sm:$0x1]
    %85 = vrot.lane.b32.xlu0 %v84, 12
    %v86 = vpop.permute.xlu0 %85
    %vm87 = vcmask 146528
    %88 = vst.msk [vmem:[#allocation0] sm:$0x1] %vm87, %v86
    %s89 = scalar_lea.vmem %s0, 1
    %v90 = vld [vmem:[%s89] sm:$0x1]
    %91 = vrot.lane.b32.xlu0 %v90, 6
    %v92 = vpop.permute.xlu0 %91
    %vm93 = vcmask 97328
    %94 = vst.msk [vmem:[#allocation0] sm:$0x1] %vm93, %v92
    %s96 = sshll.u32 1, 1
    %s97 = ssub.s32 %s96, 1
    %v99 = vld [vmem:[#allocation0] sm:%s97]
    %s100 = sshll.u32 1, 1
    %s101 = ssub.s32 %s100, 1
    %102 = vst [vmem:[%s1] sm:%s101] %v99

// kernel: tile.18
$region0: #{tile.18}
  #allocation0 [shape = 's32[1]{0}', space=sflag, size = 0x4, scoped, tag = 'scoped memory for tile.18']
  %s0 = inlined_call_operand.vmem [shape: f32[16], index: 0, kind: input, shape index: {}]
  %s1 = inlined_call_operand.vmem [shape: f32[4,16], index: 1, kind: output, shape index: {}]
  // Predicated region
  $region2: #{tile.18} parent=0 // pred_check
    _
  $region3: #{tile.18} parent=0 // pred_check_branch
    %3 = sbr.rel (0) target = $region5
  $region4: #{tile.18} parent=0 // pred_region
    _
  $region5: #{tile.18} parent=0 // pred_fallthru
    _
  %v4 = vld [vmem:[%s0] ss:$0 sm:$0xff]
  %5 = vst [vmem:[%s1] sm:$0xf] %v4

// kernel: tile.19
$region0: #{tile.19}
  %s0 = inlined_call_operand.vmem [shape: f32[4,16], index: 0, kind: input, shape index: {}]
  %s1 = inlined_call_operand.vmem [shape: f32[1,64], index: 1, kind: output, shape index: {}]
  $region1: #{tile.19} parent=0
    #allocation0 [shape = 'u8[4096]{0}', space=vmem, size = 0x1000, scoped, tag = 'scoped mem for output reshape']
    #allocation1 [shape = 'u8[4096]{0}', space=vmem, size = 0x1000, scoped, tag = 'scoped mem for input reshape']
    %s3 = sshll.u32 1, 4
    %s4 = ssub.s32 %s3, 1
    %v5 = vld [vmem:[%s0] sm:%s4]
    %6 = vst [vmem:[#allocation1] sm:%s4] %v5
    %v7 = vld [vmem:[#allocation1] sm:$0x1]
    %vm8 = vcmask 130048
    %9 = vst.msk [vmem:[#allocation0] sm:$0x1] %vm8, %v7
    %s10 = scalar_lea.vmem [#allocation1], 3
    %v11 = vld [vmem:[%s10] sm:$0x1]
    %12 = vrot.lane.b32.xlu0 %v11, 48
    %v13 = vpop.permute.xlu0 %12
    %vm14 = vcmask 523648
    %15 = vst.msk [vmem:[#allocation0] sm:$0x1] %vm14, %v13
    %s16 = scalar_lea.vmem [#allocation1], 2
    %v17 = vld [vmem:[%s16] sm:$0x1]
    %18 = vrot.lane.b32.xlu0 %v17, 32
    %v19 = vpop.permute.xlu0 %18
    %vm20 = vcmask 392448
    %21 = vst.msk [vmem:[#allocation0] sm:$0x1] %vm20, %v19
    %s22 = scalar_lea.vmem [#allocation1], 1
    %v23 = vld [vmem:[%s22] sm:$0x1]
    %24 = vrot.lane.b32.xlu0 %v23, 16
    %v25 = vpop.permute.xlu0 %24
    %vm26 = vcmask 261248
    %27 = vst.msk [vmem:[#allocation0] sm:$0x1] %vm26, %v25
    %s29 = sshll.u32 1, 1
    %s30 = ssub.s32 %s29, 1
    %v32 = vld [vmem:[#allocation0] sm:%s30]
    %s33 = sshll.u32 1, 1
    %s34 = ssub.s32 %s33, 1
    %35 = vst [vmem:[%s1] sm:%s34] %v32

// kernel: net2_forward.1
$region0: #{net2_forward.1}
  #allocation0 [shape = 'u32[]', space=smem, size = 0x4, offset = 0x4, fixed_abs, tag = 'smem constant byte address 0x4 - core index']
  #allocation1 [shape = 'u32[144,128]{1,0:T(1,128)}', space=vmem, size = 0x12000, scoped, tag = 'internal scratch']
  %s0 = inlined_call_operand.vmem [shape: f32[16,36], index: 0, kind: input, shape index: {}]
  %s1 = inlined_call_operand.vmem [shape: f32[36,96], index: 1, kind: input, shape index: {}]
  %s2 = inlined_call_operand.vmem [shape: f32[1,96], index: 2, kind: input, shape index: {}]
  %s3 = inlined_call_operand.vmem [shape: f32[96,64], index: 3, kind: input, shape index: {}]
  %s4 = inlined_call_operand.vmem [shape: f32[1,64], index: 4, kind: input, shape index: {}]
  %s5 = inlined_call_operand.vmem [shape: f32[16,128], index: 5, kind: input, shape index: {}]
  %s6 = inlined_call_operand.vmem [shape: f32[1,128], index: 6, kind: input, shape index: {}]
  %s7 = inlined_call_operand.vmem [shape: f32[16,128], index: 7, kind: output, shape index: {}]
  %s8 = sld [smem:[#allocation0]]
  $region61: #{net2_forward.1} parent=0
    _
  %s10 = ssub.s32 1, %s8
  %s11 = scalar_select 0, %s10, %s8
  loop: start=0, step=1, limit=4
  $region2: #{net2_forward.1} parent=0 // loop_pre_header
    _
  $region3: #{net2_forward.1} parent=0 // loop_header
    %s13 = sphi 0, %s17
    %p14 = scmp.ge.s32.totalorder %s13, 4
    %s23 = sphi 0, %s25
    %s26 = sphi 0, %s23
    %s27 = sphi 0, %s26
    %s43 = sphi 0, %s27
    %s47 = sphi 0, %s47
    %s49 = sphi 0, %s47
    %s50 = sphi 0, %s49
    %s64 = sphi 0, %s50
    %s68 = sphi 0, %s68
    %s70 = sphi 0, %s68
    %s71 = sphi 0, %s70
    %s85 = sphi 0, %s71
    %s89 = sphi 0, %s89
    %s91 = sphi 0, %s89
    %s92 = sphi 0, %s91
    %s106 = sphi 0, %s92
    %s110 = sphi 0, %s110
    %s112 = sphi 0, %s110
    %s113 = sphi 0, %s112
    %s127 = sphi 0, %s113
    %s131 = sphi 0, %s131
    %s133 = sphi 0, %s131
    %s134 = sphi 0, %s133
    %s148 = sphi 0, %s134
    %s152 = sphi 0, %s152
    %s154 = sphi 0, %s152
    %s155 = sphi 0, %s154
    %s169 = sphi 0, %s155
    %s175 = sphi 0, %s177
    %s178 = sphi 0, %s175
    %s179 = sphi 0, %s178
    %s195 = sphi 0, %s179
  $region4: #{net2_forward.1} parent=0 // loop_header_branch
    %16 = sbr.rel (%p14) target = $region8
  $region5: #{net2_forward.1} parent=0 // loop_body
    %s18 = ssub.s32 %s13, 1
    %s19 = ssub.s32 %s13, 2
    %s20 = sadd.s32 %s13, 1
    %s21 = ssub.s32 %s13, %s20
    %p22 = scmp.eq.s32.totalorder %s21, 0
    %s24 = sadd.s32 %s23, 1
    %s25 = scalar_select %p22, %s23, %s24
    %p28 = pneg %p22
    %p29 = scmp.eq.s32.totalorder %s13, 1
    %p30 = por %p28, %p29
    %p31 = scmp.ne.s32.totalorder %s23, %s26
    %p32 = scmp.eq.s32.totalorder %s13, 0
    %p33 = por %p31, %p32
    %p34 = scmp.ne.s32.totalorder %s23, %s26
    %p35 = scmp.eq.s32.totalorder %s18, 1
    %p36 = por %p34, %p35
    %p37 = scmp.ne.s32.totalorder %s26, %s27
    %p38 = scmp.eq.s32.totalorder %s18, 0
    %p39 = por %p37, %p38
    %p40 = scmp.ne.s32.totalorder %s26, %s27
    %p41 = scmp.eq.s32.totalorder %s19, 1
    %p42 = por %p40, %p41
    %p44 = scmp.ne.s32.totalorder %s27, %s43
    %p45 = scmp.eq.s32.totalorder %s19, 0
    %p46 = por %p44, %p45
    %s48 = sadd.s32 %s47, 1
    %p51 = scmp.eq.s32.totalorder %s13, 1
    %p52 = scmp.ne.s32.totalorder %s47, %s49
    %p53 = scmp.eq.s32.totalorder %s13, 0
    %p54 = por %p52, %p53
    %p55 = scmp.ne.s32.totalorder %s47, %s49
    %p56 = scmp.eq.s32.totalorder %s18, 1
    %p57 = por %p55, %p56
    %p58 = scmp.ne.s32.totalorder %s49, %s50
    %p59 = scmp.eq.s32.totalorder %s18, 0
    %p60 = por %p58, %p59
    %p61 = scmp.ne.s32.totalorder %s49, %s50
    %p62 = scmp.eq.s32.totalorder %s19, 1
    %p63 = por %p61, %p62
    %p65 = scmp.ne.s32.totalorder %s50, %s64
    %p66 = scmp.eq.s32.totalorder %s19, 0
    %p67 = por %p65, %p66
    %s69 = sadd.s32 %s68, 1
    %p72 = scmp.eq.s32.totalorder %s13, 1
    %p73 = scmp.ne.s32.totalorder %s68, %s70
    %p74 = scmp.eq.s32.totalorder %s13, 0
    %p75 = por %p73, %p74
    %p76 = scmp.ne.s32.totalorder %s68, %s70
    %p77 = scmp.eq.s32.totalorder %s18, 1
    %p78 = por %p76, %p77
    %p79 = scmp.ne.s32.totalorder %s70, %s71
    %p80 = scmp.eq.s32.totalorder %s18, 0
    %p81 = por %p79, %p80
    %p82 = scmp.ne.s32.totalorder %s70, %s71
    %p83 = scmp.eq.s32.totalorder %s19, 1
    %p84 = por %p82, %p83
    %p86 = scmp.ne.s32.totalorder %s71, %s85
    %p87 = scmp.eq.s32.totalorder %s19, 0
    %p88 = por %p86, %p87
    %s90 = sadd.s32 %s89, 1
    %p93 = scmp.eq.s32.totalorder %s13, 1
    %p94 = scmp.ne.s32.totalorder %s89, %s91
    %p95 = scmp.eq.s32.totalorder %s13, 0
    %p96 = por %p94, %p95
    %p97 = scmp.ne.s32.totalorder %s89, %s91
    %p98 = scmp.eq.s32.totalorder %s18, 1
    %p99 = por %p97, %p98
    %p100 = scmp.ne.s32.totalorder %s91, %s92
    %p101 = scmp.eq.s32.totalorder %s18, 0
    %p102 = por %p100, %p101
    %p103 = scmp.ne.s32.totalorder %s91, %s92
    %p104 = scmp.eq.s32.totalorder %s19, 1
    %p105 = por %p103, %p104
    %p107 = scmp.ne.s32.totalorder %s92, %s106
    %p108 = scmp.eq.s32.totalorder %s19, 0
    %p109 = por %p107, %p108
    %s111 = sadd.s32 %s110, 1
    %p114 = scmp.eq.s32.totalorder %s13, 1
    %p115 = scmp.ne.s32.totalorder %s110, %s112
    %p116 = scmp.eq.s32.totalorder %s13, 0
    %p117 = por %p115, %p116
    %p118 = scmp.ne.s32.totalorder %s110, %s112
    %p119 = scmp.eq.s32.totalorder %s18, 1
    %p120 = por %p118, %p119
    %p121 = scmp.ne.s32.totalorder %s112, %s113
    %p122 = scmp.eq.s32.totalorder %s18, 0
    %p123 = por %p121, %p122
    %p124 = scmp.ne.s32.totalorder %s112, %s113
    %p125 = scmp.eq.s32.totalorder %s19, 1
    %p126 = por %p124, %p125
    %p128 = scmp.ne.s32.totalorder %s113, %s127
    %p129 = scmp.eq.s32.totalorder %s19, 0
    %p130 = por %p128, %p129
    %s132 = sadd.s32 %s131, 1
    %p135 = scmp.eq.s32.totalorder %s13, 1
    %p136 = scmp.ne.s32.totalorder %s131, %s133
    %p137 = scmp.eq.s32.totalorder %s13, 0
    %p138 = por %p136, %p137
    %p139 = scmp.ne.s32.totalorder %s131, %s133
    %p140 = scmp.eq.s32.totalorder %s18, 1
    %p141 = por %p139, %p140
    %p142 = scmp.ne.s32.totalorder %s133, %s134
    %p143 = scmp.eq.s32.totalorder %s18, 0
    %p144 = por %p142, %p143
    %p145 = scmp.ne.s32.totalorder %s133, %s134
    %p146 = scmp.eq.s32.totalorder %s19, 1
    %p147 = por %p145, %p146
    %p149 = scmp.ne.s32.totalorder %s134, %s148
    %p150 = scmp.eq.s32.totalorder %s19, 0
    %p151 = por %p149, %p150
    %s153 = sadd.s32 %s152, 1
    %p156 = scmp.eq.s32.totalorder %s13, 1
    %p157 = scmp.ne.s32.totalorder %s152, %s154
    %p158 = scmp.eq.s32.totalorder %s13, 0
    %p159 = por %p157, %p158
    %p160 = scmp.ne.s32.totalorder %s152, %s154
    %p161 = scmp.eq.s32.totalorder %s18, 1
    %p162 = por %p160, %p161
    %p163 = scmp.ne.s32.totalorder %s154, %s155
    %p164 = scmp.eq.s32.totalorder %s18, 0
    %p165 = por %p163, %p164
    %p166 = scmp.ne.s32.totalorder %s154, %s155
    %p167 = scmp.eq.s32.totalorder %s19, 1
    %p168 = por %p166, %p167
    %p170 = scmp.ne.s32.totalorder %s155, %s169
    %p171 = scmp.eq.s32.totalorder %s19, 0
    %p172 = por %p170, %p171
    %s173 = ssub.s32 %s13, %s20
    %p174 = scmp.eq.s32.totalorder %s173, 0
    %s176 = sadd.s32 %s175, 1
    %s177 = scalar_select %p174, %s175, %s176
    %p180 = pneg %p174
    %p181 = scmp.eq.s32.totalorder %s13, 1
    %p182 = por %p180, %p181
    %p183 = scmp.ne.s32.totalorder %s175, %s178
    %p184 = scmp.eq.s32.totalorder %s13, 0
    %p185 = por %p183, %p184
    %p186 = scmp.ne.s32.totalorder %s175, %s178
    %p187 = scmp.eq.s32.totalorder %s18, 1
    %p188 = por %p186, %p187
    %p189 = scmp.ne.s32.totalorder %s178, %s179
    %p190 = scmp.eq.s32.totalorder %s18, 0
    %p191 = por %p189, %p190
    %p192 = scmp.ne.s32.totalorder %s178, %s179
    %p193 = scmp.eq.s32.totalorder %s19, 1
    %p194 = por %p192, %p193
    %p196 = scmp.ne.s32.totalorder %s179, %s195
    %p197 = scmp.eq.s32.totalorder %s19, 0
    %p198 = por %p196, %p197
    %p199 = scmp.le.s32.totalorder 1, %s13
    %p200 = scmp.lt.s32.totalorder %s13, 3
    %p201 = pnand %p199, %p200
    %p202 = pneg %p201
    // Predicated region
    $region9: #{net2_forward.1} parent=5 // pred_check
      _
    $region10: #{net2_forward.1} parent=5 // pred_check_branch
      %204 = sbr.rel (%p201) target = $region12
    $region11: #{net2_forward.1} parent=5 // pred_region
      %s205 = ssub.s32 %s13, 1
      // Predicated region
      $region13: #{net2_forward.1} parent=11 // pred_check
        %p206 = pneg %p60
      $region14: #{net2_forward.1} parent=11 // pred_check_branch
        %208 = sbr.rel (%p206) target = $region16
      $region15: #{net2_forward.1} parent=11 // pred_region
        _
      $region16: #{net2_forward.1} parent=11 // pred_fallthru
        _
      // Predicated region
      $region17: #{net2_forward.1} parent=11 // pred_check
        %p209 = pneg %p81
      $region18: #{net2_forward.1} parent=11 // pred_check_branch
        %211 = sbr.rel (%p209) target = $region20
      $region19: #{net2_forward.1} parent=11 // pred_region
        _
      $region20: #{net2_forward.1} parent=11 // pred_fallthru
        _
      // Predicated region
      $region21: #{net2_forward.1} parent=11 // pred_check
        %p212 = pneg %p102
      $region22: #{net2_forward.1} parent=11 // pred_check_branch
        %214 = sbr.rel (%p212) target = $region24
      $region23: #{net2_forward.1} parent=11 // pred_region
        _
      $region24: #{net2_forward.1} parent=11 // pred_fallthru
        _
      // Predicated region
      $region25: #{net2_forward.1} parent=11 // pred_check
        %p215 = pneg %p123
      $region26: #{net2_forward.1} parent=11 // pred_check_branch
        %217 = sbr.rel (%p215) target = $region28
      $region27: #{net2_forward.1} parent=11 // pred_region
        _
      $region28: #{net2_forward.1} parent=11 // pred_fallthru
        _
      // Predicated region
      $region29: #{net2_forward.1} parent=11 // pred_check
        %p218 = pneg %p144
      $region30: #{net2_forward.1} parent=11 // pred_check_branch
        %220 = sbr.rel (%p218) target = $region32
      $region31: #{net2_forward.1} parent=11 // pred_region
        _
      $region32: #{net2_forward.1} parent=11 // pred_fallthru
        _
      // Predicated region
      $region33: #{net2_forward.1} parent=11 // pred_check
        %p221 = pneg %p165
      $region34: #{net2_forward.1} parent=11 // pred_check_branch
        %223 = sbr.rel (%p221) target = $region36
      $region35: #{net2_forward.1} parent=11 // pred_region
        _
      $region36: #{net2_forward.1} parent=11 // pred_fallthru
        _
    $region12: #{net2_forward.1} parent=5 // pred_fallthru
      _
    %p224 = scmp.lt.s32.totalorder %s13, 2
    // Predicated region
    $region37: #{net2_forward.1} parent=5 // pred_check
      %p225 = pneg %p224
    $region38: #{net2_forward.1} parent=5 // pred_check_branch
      %227 = sbr.rel (%p225) target = $region40
    $region39: #{net2_forward.1} parent=5 // pred_region
      // Predicated region
      $region41: #{net2_forward.1} parent=39 // pred_check
        %p228 = pneg %p33
      $region42: #{net2_forward.1} parent=39 // pred_check_branch
        %230 = sbr.rel (%p228) target = $region44
      $region43: #{net2_forward.1} parent=39 // pred_region
        %p231 = scmp.lt.s32.totalorder %s13, 1
        %s232 = scalar_select %p231, %s13, 1
        %s233 = smul.addr %s232, 8
        %s234 = scalar_lea.vmem %s0, %s233
      $region44: #{net2_forward.1} parent=39 // pred_fallthru
        _
    $region40: #{net2_forward.1} parent=5 // pred_fallthru
      _
    %p235 = scmp.le.s32.totalorder 1, %s13
    %p236 = scmp.lt.s32.totalorder %s13, 3
    %p237 = pnand %p235, %p236
    %p238 = pneg %p237
    // Predicated region
    $region45: #{net2_forward.1} parent=5 // pred_check
      _
    $region46: #{net2_forward.1} parent=5 // pred_check_branch
      %240 = sbr.rel (%p237) target = $region48
    $region47: #{net2_forward.1} parent=5 // pred_region
      %s241 = ssub.s32 %s13, 1
      %p242 = scmp.lt.s32.totalorder %s18, 1
      %s243 = scalar_select %p242, %s18, 1
      %s244 = smul.addr %s243, 8
      %s245 = scalar_lea.vmem %s0, %s244
      %p246 = pneg %p39
      %p247 = pneg %p36
      %p248 = pneg %p60
      %p249 = pneg %p57
      %p250 = pneg %p81
      %p251 = pneg %p78
      %p252 = pneg %p102
      %p253 = pneg %p99
      %p254 = pneg %p123
      %p255 = pneg %p120
      %p256 = pneg %p144
      %p257 = pneg %p141
      %p258 = pneg %p165
      %p259 = pneg %p162
      %p260 = pneg %p191
      %p261 = pneg %p188
      %p262 = scmp.lt.s32.totalorder %s18, 1
      %s263 = scalar_select %p262, %s18, 1
      %s264 = smul.addr %s263, 8
      %s265 = scalar_lea.vmem %s7, %s264
      %p266 = scmp.lt.s32.totalorder %s18, 1
      %s267 = scalar_select %p266, %s18, 1
      %s268 = smul.addr %s267, 8
      %s269 = scalar_lea.vmem %s0, %s268
      %p270 = scmp.lt.s32.totalorder %s18, 1
      %s271 = scalar_select %p270, %s18, 1
      %s272 = smul.addr %s271, 8
      %s273 = scalar_lea.vmem %s7, %s272
      %v274 = vld [vmem:[%s269] sm:$0xff]
      %v275 = vld [vmem:[%s1] sm:$0xff]
      %v276 = vld [vmem:[%s1 + $0x8] sm:$0xff]
      %v277 = vld [vmem:[%s1 + $0x10] sm:$0xff]
      %v278 = vld [vmem:[%s1 + $0x18] sm:$0xff]
      %v279 = vld [vmem:[%s1 + $0x20] sm:$0xf]
      %v280 = vld [vmem:[%s2] sm:$0x1]
      %v282 = vlaneseq
      %v283 = vshrl.u32 %v282, 7
      %v284 = vsub.s32 0, %v283
      %v285 = vrot.slane %v280, %v284
      %vm287 = vcmask 293888
      %v289 = vsel %vm287, %v274, 0
      %vm291 = vcmask 1043456
      %v293 = vsel %vm291, %v279, 0
      %295 = vmatprep.subr.mxu0 0.0
      %296 = vmatpush1.msra.mxu0 0.0
      %297 = vmatprep.subr.mxu0 0.0
      %298 = vmatpush1.msra.mxu0 0.0
      %299 = vmatprep.subr.mxu0 0.0
      %300 = vmatpush1.msra.mxu0 0.0
      %301 = vmatprep.subr.mxu0 0.0
      %302 = vmatpush1.msra.mxu0 0.0
      %303 = vmatprep.subr.mxu0 0.0
      %304 = vmatpush1.msra.mxu0 0.0
      %305 = vmatprep.subr.mxu0 0.0
      %306 = vmatpush1.msra.mxu0 0.0
      %307 = vmatprep.subr.mxu0 0.0
      %308 = vmatpush1.msra.mxu0 0.0
      %309 = vmatprep.subr.mxu0 0.0
      %310 = vmatpush1.msra.mxu0 0.0
      %311 = vmatprep.subr.mxu0 0.0
      %312 = vmatpush1.msra.mxu0 0.0
      %313 = vmatprep.subr.mxu0 0.0
      %314 = vmatpush1.msra.mxu0 0.0
      %315 = vmatprep.subr.mxu0 0.0
      %316 = vmatpush1.msra.mxu0 0.0
      %317 = vmatprep.subr.mxu0 0.0
      %318 = vmatpush1.msra.mxu0 %v293
      %319 = vmatprep.subr.mxu0 0.0
      %320 = vmatpush1.msra.mxu0 %v278
      %321 = vmatprep.subr.mxu0 0.0
      %322 = vmatpush1.msra.mxu0 %v277
      %323 = vmatprep.subr.mxu0 0.0
      %324 = vmatpush1.msra.mxu0 %v276
      %325 = vmatprep.subr.mxu0 0.0
      %326 = vmatpush1.msra.mxu0 %v275
      %327 = vmatprep.subr.mxu0 0.0
      %328 = vmatpush2.msra.mxu0 0.0
      %329 = vmatprep.subr.mxu0 0.0
      %330 = vmatpush2.msra.mxu0 0.0
      %331 = vmatprep.subr.mxu0 0.0
      %332 = vmatpush2.msra.mxu0 0.0
      %333 = vmatprep.subr.mxu0 0.0
      %334 = vmatpush2.msra.mxu0 0.0
      %335 = vmatprep.subr.mxu0 0.0
      %336 = vmatpush2.msra.mxu0 0.0
      %337 = vmatprep.subr.mxu0 0.0
      %338 = vmatpush2.msra.mxu0 0.0
      %339 = vmatprep.subr.mxu0 0.0
      %340 = vmatpush2.msra.mxu0 0.0
      %341 = vmatprep.subr.mxu0 0.0
      %342 = vmatpush2.msra.mxu0 0.0
      %343 = vmatprep.subr.mxu0 0.0
      %344 = vmatpush2.msra.mxu0 0.0
      %345 = vmatprep.subr.mxu0 0.0
      %346 = vmatpush2.msra.mxu0 0.0
      %347 = vmatprep.subr.mxu0 0.0
      %348 = vmatpush2.msra.mxu0 0.0
      %349 = vmatprep.subr.mxu0 0.0
      %350 = vmatpush2.msra.mxu0 0.0
      %351 = vmatprep.subr.mxu0 0.0
      %352 = vmatpush2.msra.mxu0 0.0
      %353 = vmatprep.subr.mxu0 0.0
      %354 = vmatpush2.msra.mxu0 0.0
      %355 = vmatprep.subr.mxu0 0.0
      %356 = vmatpush2.msra.mxu0 0.0
      %357 = vmatprep.subr.mxu0 0.0
      %358 = vmatpush2.msra.mxu0 0.0
      %359 = vmatprep.mubr.f32.mxu0 0.0
      %360 = vmatmul.mubr.f32.gmra.mxu0 %v289
      %v361 = vpop.f32.mrf.mxu0
      %v362 = vadd.f32 %v285, %v361
      %v363 = vpop.f32.mrf.mxu0
      %364 = vdwg.mxu0
      %v365 = vmax.f32 %v362, 0.0
      %v366 = vld [vmem:[%s3] sm:$0xff]
      %v367 = vld [vmem:[%s3 + $0x8] sm:$0xff]
      %v368 = vld [vmem:[%s3 + $0x10] sm:$0xff]
      %v369 = vld [vmem:[%s3 + $0x18] sm:$0xff]
      %v370 = vld [vmem:[%s3 + $0x20] sm:$0xff]
      %v371 = vld [vmem:[%s3 + $0x28] sm:$0xff]
      %v372 = vld [vmem:[%s3 + $0x30] sm:$0xff]
      %v373 = vld [vmem:[%s3 + $0x38] sm:$0xff]
      %v374 = vld [vmem:[%s3 + $0x40] sm:$0xff]
      %v375 = vld [vmem:[%s3 + $0x48] sm:$0xff]
      %v376 = vld [vmem:[%s3 + $0x50] sm:$0xff]
      %v377 = vld [vmem:[%s3 + $0x58] sm:$0xff]
      %v378 = vld [vmem:[%s4] sm:$0x1]
      %v380 = vlaneseq
      %v381 = vshrl.u32 %v380, 7
      %v382 = vsub.s32 0, %v381
      %v383 = vrot.slane %v378, %v382
      %vm385 = vcmask 785408
      %v387 = vsel %vm385, %v365, 0
      %389 = vmatprep.subr.mxu0 0.0
      %390 = vmatpush1.msra.mxu0 0.0
      %391 = vmatprep.subr.mxu0 0.0
      %392 = vmatpush1.msra.mxu0 0.0
      %393 = vmatprep.subr.mxu0 0.0
      %394 = vmatpush1.msra.mxu0 0.0
      %395 = vmatprep.subr.mxu0 0.0
      %396 = vmatpush1.msra.mxu0 0.0
      %397 = vmatprep.subr.mxu0 0.0
      %398 = vmatpush1.msra.mxu0 %v377
      %399 = vmatprep.subr.mxu0 0.0
      %400 = vmatpush1.msra.mxu0 %v376
      %401 = vmatprep.subr.mxu0 0.0
      %402 = vmatpush1.msra.mxu0 %v375
      %403 = vmatprep.subr.mxu0 0.0
      %404 = vmatpush1.msra.mxu0 %v374
      %405 = vmatprep.subr.mxu0 0.0
      %406 = vmatpush1.msra.mxu0 %v373
      %407 = vmatprep.subr.mxu0 0.0
      %408 = vmatpush1.msra.mxu0 %v372
      %409 = vmatprep.subr.mxu0 0.0
      %410 = vmatpush1.msra.mxu0 %v371
      %411 = vmatprep.subr.mxu0 0.0
      %412 = vmatpush1.msra.mxu0 %v370
      %413 = vmatprep.subr.mxu0 0.0
      %414 = vmatpush1.msra.mxu0 %v369
      %415 = vmatprep.subr.mxu0 0.0
      %416 = vmatpush1.msra.mxu0 %v368
      %417 = vmatprep.subr.mxu0 0.0
      %418 = vmatpush1.msra.mxu0 %v367
      %419 = vmatprep.subr.mxu0 0.0
      %420 = vmatpush1.msra.mxu0 %v366
      %421 = vmatprep.subr.mxu0 0.0
      %422 = vmatpush2.msra.mxu0 0.0
      %423 = vmatprep.subr.mxu0 0.0
      %424 = vmatpush2.msra.mxu0 0.0
      %425 = vmatprep.subr.mxu0 0.0
      %426 = vmatpush2.msra.mxu0 0.0
      %427 = vmatprep.subr.mxu0 0.0
      %428 = vmatpush2.msra.mxu0 0.0
      %429 = vmatprep.subr.mxu0 0.0
      %430 = vmatpush2.msra.mxu0 0.0
      %431 = vmatprep.subr.mxu0 0.0
      %432 = vmatpush2.msra.mxu0 0.0
      %433 = vmatprep.subr.mxu0 0.0
      %434 = vmatpush2.msra.mxu0 0.0
      %435 = vmatprep.subr.mxu0 0.0
      %436 = vmatpush2.msra.mxu0 0.0
      %437 = vmatprep.subr.mxu0 0.0
      %438 = vmatpush2.msra.mxu0 0.0
      %439 = vmatprep.subr.mxu0 0.0
      %440 = vmatpush2.msra.mxu0 0.0
      %441 = vmatprep.subr.mxu0 0.0
      %442 = vmatpush2.msra.mxu0 0.0
      %443 = vmatprep.subr.mxu0 0.0
      %444 = vmatpush2.msra.mxu0 0.0
      %445 = vmatprep.subr.mxu0 0.0
      %446 = vmatpush2.msra.mxu0 0.0
      %447 = vmatprep.subr.mxu0 0.0
      %448 = vmatpush2.msra.mxu0 0.0
      %449 = vmatprep.subr.mxu0 0.0
      %450 = vmatpush2.msra.mxu0 0.0
      %451 = vmatprep.subr.mxu0 0.0
      %452 = vmatpush2.msra.mxu0 0.0
      %453 = vmatprep.mubr.f32.mxu0 0.0
      %454 = vmatmul.mubr.f32.gmra.mxu0 %v387
      %v455 = vpop.f32.mrf.mxu0
      %v456 = vadd.f32 %v383, %v455
      %v457 = vpop.f32.mrf.mxu0
      %458 = vdwg.mxu0
      %v459 = vmax.f32 %v456, 0.0
      %461 = vrot.lane.b32.xlu0 %v459, 112
      %v462 = vpop.permute.xlu0 %461
      %v464 = vmax.f32 %v459, %v462
      %466 = vrot.lane.b32.xlu0 %v464, 96
      %v467 = vpop.permute.xlu0 %466
      %v469 = vmax.f32 %v464, %v467
      %v470 = vld [vmem:[%s5] sm:$0xff]
      %v471 = vld [vmem:[%s5 + $0x8] sm:$0xff]
      %v472 = vld [vmem:[%s6] sm:$0x1]
      %v474 = vlaneseq
      %v475 = vshrl.u32 %v474, 7
      %v476 = vsub.s32 0, %v475
      %v477 = vrot.slane %v472, %v476
      %vm479 = vcmask 130048
      %v481 = vsel %vm479, %v469, 0
      %483 = vmatprep.subr.mxu0 0.0
      %484 = vmatpush1.msra.mxu0 0.0
      %485 = vmatprep.subr.mxu0 0.0
      %486 = vmatpush1.msra.mxu0 0.0
      %487 = vmatprep.subr.mxu0 0.0
      %488 = vmatpush1.msra.mxu0 0.0
      %489 = vmatprep.subr.mxu0 0.0
      %490 = vmatpush1.msra.mxu0 0.0
      %491 = vmatprep.subr.mxu0 0.0
      %492 = vmatpush1.msra.mxu0 0.0
      %493 = vmatprep.subr.mxu0 0.0
      %494 = vmatpush1.msra.mxu0 0.0
      %495 = vmatprep.subr.mxu0 0.0
      %496 = vmatpush1.msra.mxu0 0.0
      %497 = vmatprep.subr.mxu0 0.0
      %498 = vmatpush1.msra.mxu0 0.0
      %499 = vmatprep.subr.mxu0 0.0
      %500 = vmatpush1.msra.mxu0 0.0
      %501 = vmatprep.subr.mxu0 0.0
      %502 = vmatpush1.msra.mxu0 0.0
      %503 = vmatprep.subr.mxu0 0.0
      %504 = vmatpush1.msra.mxu0 0.0
      %505 = vmatprep.subr.mxu0 0.0
      %506 = vmatpush1.msra.mxu0 0.0
      %507 = vmatprep.subr.mxu0 0.0
      %508 = vmatpush1.msra.mxu0 0.0
      %509 = vmatprep.subr.mxu0 0.0
      %510 = vmatpush1.msra.mxu0 0.0
      %511 = vmatprep.subr.mxu0 0.0
      %512 = vmatpush1.msra.mxu0 %v471
      %513 = vmatprep.subr.mxu0 0.0
      %514 = vmatpush1.msra.mxu0 %v470
      %515 = vmatprep.subr.mxu0 0.0
      %516 = vmatpush2.msra.mxu0 0.0
      %517 = vmatprep.subr.mxu0 0.0
      %518 = vmatpush2.msra.mxu0 0.0
      %519 = vmatprep.subr.mxu0 0.0
      %520 = vmatpush2.msra.mxu0 0.0
      %521 = vmatprep.subr.mxu0 0.0
      %522 = vmatpush2.msra.mxu0 0.0
      %523 = vmatprep.subr.mxu0 0.0
      %524 = vmatpush2.msra.mxu0 0.0
      %525 = vmatprep.subr.mxu0 0.0
      %526 = vmatpush2.msra.mxu0 0.0
      %527 = vmatprep.subr.mxu0 0.0
      %528 = vmatpush2.msra.mxu0 0.0
      %529 = vmatprep.subr.mxu0 0.0
      %530 = vmatpush2.msra.mxu0 0.0
      %531 = vmatprep.subr.mxu0 0.0
      %532 = vmatpush2.msra.mxu0 0.0
      %533 = vmatprep.subr.mxu0 0.0
      %534 = vmatpush2.msra.mxu0 0.0
      %535 = vmatprep.subr.mxu0 0.0
      %536 = vmatpush2.msra.mxu0 0.0
      %537 = vmatprep.subr.mxu0 0.0
      %538 = vmatpush2.msra.mxu0 0.0
      %539 = vmatprep.subr.mxu0 0.0
      %540 = vmatpush2.msra.mxu0 0.0
      %541 = vmatprep.subr.mxu0 0.0
      %542 = vmatpush2.msra.mxu0 0.0
      %543 = vmatprep.subr.mxu0 0.0
      %544 = vmatpush2.msra.mxu0 0.0
      %545 = vmatprep.subr.mxu0 0.0
      %546 = vmatpush2.msra.mxu0 0.0
      %547 = vmatprep.mubr.f32.mxu0 0.0
      %548 = vmatmul.mubr.f32.gmra.mxu0 %v481
      %v549 = vpop.f32.mrf.mxu0
      %v550 = vadd.f32 %v477, %v549
      %v551 = vpop.f32.mrf.mxu0
      %552 = vdwg.mxu0
      %553 = vst [vmem:[%s273] sm:$0xff] %v550
      %p554 = scmp.lt.s32.totalorder %s18, 1
      %s555 = scalar_select %p554, %s18, 1
      %s556 = smul.addr %s555, 8
      %s557 = scalar_lea.vmem %s7, %s556
      // Predicated region
      $region49: #{net2_forward.1} parent=47 // pred_check
        %p558 = pneg %p188
      $region50: #{net2_forward.1} parent=47 // pred_check_branch
        %560 = sbr.rel (%p558) target = $region52
      $region51: #{net2_forward.1} parent=47 // pred_region
        _
      $region52: #{net2_forward.1} parent=47 // pred_fallthru
        _
    $region48: #{net2_forward.1} parent=5 // pred_fallthru
      _
    %p561 = scmp.le.s32.totalorder 2, %s13
    // Predicated region
    $region53: #{net2_forward.1} parent=5 // pred_check
      %p562 = pneg %p561
    $region54: #{net2_forward.1} parent=5 // pred_check_branch
      %564 = sbr.rel (%p562) target = $region56
    $region55: #{net2_forward.1} parent=5 // pred_region
      %s565 = ssub.s32 %s13, 2
      // Predicated region
      $region57: #{net2_forward.1} parent=55 // pred_check
        %p566 = pneg %p194
      $region58: #{net2_forward.1} parent=55 // pred_check_branch
        %568 = sbr.rel (%p566) target = $region60
      $region59: #{net2_forward.1} parent=55 // pred_region
        %p569 = scmp.lt.s32.totalorder %s19, 1
        %s570 = scalar_select %p569, %s19, 1
        %s571 = smul.addr %s570, 8
        %s572 = scalar_lea.vmem %s7, %s571
      $region60: #{net2_forward.1} parent=55 // pred_fallthru
        _
    $region56: #{net2_forward.1} parent=5 // pred_fallthru
      _
  $region6: #{net2_forward.1} parent=0 // loop_footer
    %s17 = sadd.s32 1, %s13
  $region7: #{net2_forward.1} parent=0 // loop_footer_branch
    %12 = sbr.rel target = $region3
  $region8: #{net2_forward.1} parent=0 // loop_exit
    _

</llo_original>
